<compile_context>
chip_gen: v7x
topology: tpu7x:2x2x1
jax: 0.10.0
libtpu: 0.0.40
codegen_flags: <defaults>
</compile_context>

<pallas_src>
import jax
import jax.numpy as jnp
from jax.experimental import pallas as pl
from jax.experimental.pallas import tpu as pltpu

LANES = 1024       # lane-dense last dim (multiple of 128)
TILE_ROWS = 1024   # rows per grid step -> 4 MiB f32 tile (16 MiB dbl-buffered I/O)


def mlp_kernel(p_ref, x_ref, o_ref):
    # p_ref : (22,) f32 in SMEM, flat packed parameters:
    #         [0:3]   w1   (input -> h1_j)
    #         [3:6]   b1
    #         [6:15]  w2   row-major (in j, out k): w2[j,k] at 6 + j*3 + k
    #         [15:18] b2
    #         [18:21] w3   (h2_k -> output)
    #         [21]    b3
    # x_ref : (block_rows, LANES) f32 tile; every element is one "batch row".
    x = x_ref[...]

    # Layer 1: h1_j = relu(x * w1_j + b1_j).  Scalars splat just before use.
    h1 = [jnp.maximum(x * p_ref[j] + p_ref[3 + j], 0.0) for j in range(3)]

    # Layer 2 + output fused:
    #   y = sum_k relu(sum_j h1_j * w2[j,k] + b2_k) * w3_k + b3
    # Accumulate y incrementally so h2_k is a transient (low live-vreg count).
    y = None
    for k in range(3):
        pre = (h1[0] * p_ref[6 + k]        # w2[0, k]
               + h1[1] * p_ref[9 + k]      # w2[1, k]
               + h1[2] * p_ref[12 + k]     # w2[2, k]
               + p_ref[15 + k])            # b2[k]
        contrib = jnp.maximum(pre, 0.0) * p_ref[18 + k]   # * w3[k]
        y = contrib if y is None else y + contrib
    y = y + p_ref[21]                      # + b3

    o_ref[...] = y.astype(o_ref.dtype)


def _pack_params(params):
    w1, b1, w2, b2, w3, b3 = params
    # NOTE: weights are stored (in, out) row-major, matching init_params and
    # the JAX reference.  PyTorch nn.Linear .weight is (out, in): transpose
    # real Torch state_dict weights before packing.
    return jnp.concatenate(
        [
            jnp.ravel(w1),  # (3,)
            jnp.ravel(b1),  # (3,)
            jnp.ravel(w2),  # (9,) row-major (in, out)
            jnp.ravel(b2),  # (3,)
            jnp.ravel(w3),  # (3,)
            jnp.ravel(b3),  # (1,)
        ]
    ).astype(jnp.float32)


def torch_mlp_forward(x, params):
    """x: any shape; flattened to (-1, 1) like the PyTorch forward.
    Returns (N, 1) float32, N = x.size."""
    p = _pack_params(params)

    x_flat = jnp.ravel(x).astype(jnp.float32)
    n = x_flat.shape[0]

    # Lane-dense layout: n elements -> (rows, LANES).  Pad only up to the next
    # LANES multiple (<= 1023 elements), and only if actually needed.
    rows = pl.cdiv(n, LANES)
    n_pad = rows * LANES
    if n_pad != n:
        x_flat = jnp.pad(x_flat, (0, n_pad - n))
    x2 = x_flat.reshape(rows, LANES)

    # Single full-array block when small; otherwise (TILE_ROWS, LANES) blocks
    # with a ragged last block handled by Pallas (block is (8,128)-aligned).
    block_rows = rows if rows <= TILE_ROWS else TILE_ROWS
    grid = (pl.cdiv(rows, block_rows),)

    out2 = pl.pallas_call(
        mlp_kernel,
        out_shape=jax.ShapeDtypeStruct((rows, LANES), jnp.float32),
        grid=grid,
        in_specs=[
            pl.BlockSpec(memory_space=pltpu.MemorySpace.SMEM),      # params (22,)
            pl.BlockSpec((block_rows, LANES), lambda i: (i, 0)),    # x tile
        ],
        out_specs=pl.BlockSpec((block_rows, LANES), lambda i: (i, 0)),
        compiler_params=pltpu.CompilerParams(
            # v7x: if profiling shows one TC running the whole grid, switch to
            # (pltpu.CORE_PARALLEL,) — this kernel is VALU-bound there.
            dimension_semantics=("parallel",),
            vmem_limit_bytes=32 * 1024 * 1024,      # safe on v5e/v6e/v7x
        ),
        cost_estimate=pl.CostEstimate(
            flops=30 * n_pad,            # ~15 MAC -> ~30 flops per element
            transcendentals=0,
            bytes_accessed=8 * n_pad,    # 4 B in + 4 B out per element
        ),
    )(p, x2)

    if n_pad == n:
        # No padding was added: reshape is free (no copy, no slice).
        return out2.reshape(n, 1)
    # Padded tail produces nonzero values (relu of biases); slice it off to
    # preserve the PyTorch (N, 1) output contract.
    return out2.reshape(-1)[:n].reshape(n, 1)


def init_params(key):
    """Deterministic init mimicking nn.Linear defaults:
    U(-1/sqrt(fan_in), 1/sqrt(fan_in)) for weights (stored as (in, out)) and biases."""
    ks = jax.random.split(key, 6)

    def lin(kw, kb, fan_in, fan_out):
        bound = 1.0 / jnp.sqrt(fan_in)
        w = jax.random.uniform(kw, (fan_in, fan_out), jnp.float32, -bound, bound)
        b = jax.random.uniform(kb, (fan_out,), jnp.float32, -bound, bound)
        return w, b

    w1, b1 = lin(ks[0], ks[1], 1, 3)
    w2, b2 = lin(ks[2], ks[3], 3, 3)
    w3, b3 = lin(ks[4], ks[5], 3, 1)
    return (w1, b1, w2, b2, w3, b3)


def reference_forward(x, params):
    """Pure-JAX reference of the PyTorch forward (for sanity check)."""
    w1, b1, w2, b2, w3, b3 = params
    h = x.reshape(-1, 1).astype(jnp.float32)
    h = jnp.maximum(h @ w1 + b1, 0.0)
    h = jnp.maximum(h @ w2 + b2, 0.0)
    return h @ w3 + b3


if __name__ == "__main__":
    key = jax.random.PRNGKey(0)
    k_param, k_x = jax.random.split(key)

    params = init_params(k_param)
    # small input; forward flattens it to (32, 1) rows
    x = jax.random.normal(k_x, (2, 16), jnp.float32)

    out = torch_mlp_forward(x, params)
    out = jax.block_until_ready(out)

    ref = reference_forward(x, params)
    assert out.shape == (32, 1)
    assert jnp.allclose(out, ref, atol=1e-5, rtol=1e-5)

    print("KERNEL_OK")
</pallas_src>

<mosaic_0001>
module attributes {stable_mosaic.version = 11 : i64} {
  func.func @mlp_kernel(%arg0: i32, %arg1: memref<22xf32, #tpu.memory_space<smem>>, %arg2: memref<1x1024xf32, #tpu.memory_space<vmem>>, %arg3: memref<1x1024xf32, #tpu.memory_space<vmem>>) attributes {dimension_semantics = [#tpu.dimension_semantics<parallel>], iteration_bounds = array<i64: 1>, scalar_prefetch = 0 : i64, scratch_operands = 0 : i64, tpu.core_type = #tpu.core_type<tc>, window_params = [{transform_indices = @transform_0, window_bounds = array<i64: 22>}, {transform_indices = @transform_1, window_bounds = array<i64: 1, 1024>}, {transform_indices = @transform_2, window_bounds = array<i64: 1, 1024>}]} {
    %c0 = arith.constant 0 : index
    %c0_0 = arith.constant 0 : index
    %0 = vector.load %arg2[%c0, %c0_0] : memref<1x1024xf32, #tpu.memory_space<vmem>>, vector<1x1024xf32>
    %c0_1 = arith.constant 0 : index
    %1 = memref.load %arg1[%c0_1] : memref<22xf32, #tpu.memory_space<smem>>
    %2 = vector.broadcast %1 : f32 to vector<1x1024xf32>
    %3 = arith.mulf %0, %2 : vector<1x1024xf32>
    %c3 = arith.constant 3 : index
    %4 = memref.load %arg1[%c3] : memref<22xf32, #tpu.memory_space<smem>>
    %5 = vector.broadcast %4 : f32 to vector<1x1024xf32>
    %6 = arith.addf %3, %5 : vector<1x1024xf32>
    %cst = arith.constant 0.000000e+00 : f32
    %7 = vector.broadcast %cst : f32 to vector<1x1024xf32>
    %8 = arith.maximumf %6, %7 : vector<1x1024xf32>
    %c1 = arith.constant 1 : index
    %9 = memref.load %arg1[%c1] : memref<22xf32, #tpu.memory_space<smem>>
    %10 = vector.broadcast %9 : f32 to vector<1x1024xf32>
    %11 = arith.mulf %0, %10 : vector<1x1024xf32>
    %c4 = arith.constant 4 : index
    %12 = memref.load %arg1[%c4] : memref<22xf32, #tpu.memory_space<smem>>
    %13 = vector.broadcast %12 : f32 to vector<1x1024xf32>
    %14 = arith.addf %11, %13 : vector<1x1024xf32>
    %cst_2 = arith.constant 0.000000e+00 : f32
    %15 = vector.broadcast %cst_2 : f32 to vector<1x1024xf32>
    %16 = arith.maximumf %14, %15 : vector<1x1024xf32>
    %c2 = arith.constant 2 : index
    %17 = memref.load %arg1[%c2] : memref<22xf32, #tpu.memory_space<smem>>
    %18 = vector.broadcast %17 : f32 to vector<1x1024xf32>
    %19 = arith.mulf %0, %18 : vector<1x1024xf32>
    %c5 = arith.constant 5 : index
    %20 = memref.load %arg1[%c5] : memref<22xf32, #tpu.memory_space<smem>>
    %21 = vector.broadcast %20 : f32 to vector<1x1024xf32>
    %22 = arith.addf %19, %21 : vector<1x1024xf32>
    %cst_3 = arith.constant 0.000000e+00 : f32
    %23 = vector.broadcast %cst_3 : f32 to vector<1x1024xf32>
    %24 = arith.maximumf %22, %23 : vector<1x1024xf32>
    %c6 = arith.constant 6 : index
    %25 = memref.load %arg1[%c6] : memref<22xf32, #tpu.memory_space<smem>>
    %26 = vector.broadcast %25 : f32 to vector<1x1024xf32>
    %27 = arith.mulf %8, %26 : vector<1x1024xf32>
    %c9 = arith.constant 9 : index
    %28 = memref.load %arg1[%c9] : memref<22xf32, #tpu.memory_space<smem>>
    %29 = vector.broadcast %28 : f32 to vector<1x1024xf32>
    %30 = arith.mulf %16, %29 : vector<1x1024xf32>
    %31 = arith.addf %27, %30 : vector<1x1024xf32>
    %c12 = arith.constant 12 : index
    %32 = memref.load %arg1[%c12] : memref<22xf32, #tpu.memory_space<smem>>
    %33 = vector.broadcast %32 : f32 to vector<1x1024xf32>
    %34 = arith.mulf %24, %33 : vector<1x1024xf32>
    %35 = arith.addf %31, %34 : vector<1x1024xf32>
    %c15 = arith.constant 15 : index
    %36 = memref.load %arg1[%c15] : memref<22xf32, #tpu.memory_space<smem>>
    %37 = vector.broadcast %36 : f32 to vector<1x1024xf32>
    %38 = arith.addf %35, %37 : vector<1x1024xf32>
    %cst_4 = arith.constant 0.000000e+00 : f32
    %39 = vector.broadcast %cst_4 : f32 to vector<1x1024xf32>
    %40 = arith.maximumf %38, %39 : vector<1x1024xf32>
    %c18 = arith.constant 18 : index
    %41 = memref.load %arg1[%c18] : memref<22xf32, #tpu.memory_space<smem>>
    %42 = vector.broadcast %41 : f32 to vector<1x1024xf32>
    %43 = arith.mulf %40, %42 : vector<1x1024xf32>
    %c7 = arith.constant 7 : index
    %44 = memref.load %arg1[%c7] : memref<22xf32, #tpu.memory_space<smem>>
    %45 = vector.broadcast %44 : f32 to vector<1x1024xf32>
    %46 = arith.mulf %8, %45 : vector<1x1024xf32>
    %c10 = arith.constant 10 : index
    %47 = memref.load %arg1[%c10] : memref<22xf32, #tpu.memory_space<smem>>
    %48 = vector.broadcast %47 : f32 to vector<1x1024xf32>
    %49 = arith.mulf %16, %48 : vector<1x1024xf32>
    %50 = arith.addf %46, %49 : vector<1x1024xf32>
    %c13 = arith.constant 13 : index
    %51 = memref.load %arg1[%c13] : memref<22xf32, #tpu.memory_space<smem>>
    %52 = vector.broadcast %51 : f32 to vector<1x1024xf32>
    %53 = arith.mulf %24, %52 : vector<1x1024xf32>
    %54 = arith.addf %50, %53 : vector<1x1024xf32>
    %c16 = arith.constant 16 : index
    %55 = memref.load %arg1[%c16] : memref<22xf32, #tpu.memory_space<smem>>
    %56 = vector.broadcast %55 : f32 to vector<1x1024xf32>
    %57 = arith.addf %54, %56 : vector<1x1024xf32>
    %cst_5 = arith.constant 0.000000e+00 : f32
    %58 = vector.broadcast %cst_5 : f32 to vector<1x1024xf32>
    %59 = arith.maximumf %57, %58 : vector<1x1024xf32>
    %c19 = arith.constant 19 : index
    %60 = memref.load %arg1[%c19] : memref<22xf32, #tpu.memory_space<smem>>
    %61 = vector.broadcast %60 : f32 to vector<1x1024xf32>
    %62 = arith.mulf %59, %61 : vector<1x1024xf32>
    %63 = arith.addf %43, %62 : vector<1x1024xf32>
    %c8 = arith.constant 8 : index
    %64 = memref.load %arg1[%c8] : memref<22xf32, #tpu.memory_space<smem>>
    %65 = vector.broadcast %64 : f32 to vector<1x1024xf32>
    %66 = arith.mulf %8, %65 : vector<1x1024xf32>
    %c11 = arith.constant 11 : index
    %67 = memref.load %arg1[%c11] : memref<22xf32, #tpu.memory_space<smem>>
    %68 = vector.broadcast %67 : f32 to vector<1x1024xf32>
    %69 = arith.mulf %16, %68 : vector<1x1024xf32>
    %70 = arith.addf %66, %69 : vector<1x1024xf32>
    %c14 = arith.constant 14 : index
    %71 = memref.load %arg1[%c14] : memref<22xf32, #tpu.memory_space<smem>>
    %72 = vector.broadcast %71 : f32 to vector<1x1024xf32>
    %73 = arith.mulf %24, %72 : vector<1x1024xf32>
    %74 = arith.addf %70, %73 : vector<1x1024xf32>
    %c17 = arith.constant 17 : index
    %75 = memref.load %arg1[%c17] : memref<22xf32, #tpu.memory_space<smem>>
    %76 = vector.broadcast %75 : f32 to vector<1x1024xf32>
    %77 = arith.addf %74, %76 : vector<1x1024xf32>
    %cst_6 = arith.constant 0.000000e+00 : f32
    %78 = vector.broadcast %cst_6 : f32 to vector<1x1024xf32>
    %79 = arith.maximumf %77, %78 : vector<1x1024xf32>
    %c20 = arith.constant 20 : index
    %80 = memref.load %arg1[%c20] : memref<22xf32, #tpu.memory_space<smem>>
    %81 = vector.broadcast %80 : f32 to vector<1x1024xf32>
    %82 = arith.mulf %79, %81 : vector<1x1024xf32>
    %83 = arith.addf %63, %82 : vector<1x1024xf32>
    %c21 = arith.constant 21 : index
    %84 = memref.load %arg1[%c21] : memref<22xf32, #tpu.memory_space<smem>>
    %85 = vector.broadcast %84 : f32 to vector<1x1024xf32>
    %86 = arith.addf %83, %85 : vector<1x1024xf32>
    %c0_7 = arith.constant 0 : index
    %c0_8 = arith.constant 0 : index
    %87 = vector.load %arg3[%c0_7, %c0_8] : memref<1x1024xf32, #tpu.memory_space<vmem>>, vector<1x1024xf32>
    tpu.vector_store %arg3[%c0_7, %c0_8], %86 {strides = array<i32>} : memref<1x1024xf32, #tpu.memory_space<vmem>>, vector<1x1024xf32>,
    return
  }
  func.func @transform_0(%arg0: i32) -> i32 {
    %c0_i32 = arith.constant 0 : i32
    %c0_i32_0 = arith.constant 0 : i32
    return %c0_i32 : i32
  }
  func.func @transform_1(%arg0: i32) -> (i32, i32) {
    %c0_i32 = arith.constant 0 : i32
    %c0_i32_0 = arith.constant 0 : i32
    return %arg0, %c0_i32 : i32, i32
  }
  func.func @transform_2(%arg0: i32) -> (i32, i32) {
    %c0_i32 = arith.constant 0 : i32
    %c0_i32_0 = arith.constant 0 : i32
    return %arg0, %c0_i32 : i32, i32
  }
}

</mosaic_0001>

<llo_original>
// kernel: tpu_custom_call.1
$region0: #{tpu_custom_call.1}
  #allocation0 [shape = 'u32[]', space=smem, size = 0x4, offset = 0x4, fixed_abs, tag = 'smem constant byte address 0x4 - core index']
  #allocation1 [shape = 'u32[144,128]{1,0:T(1,128)}', space=vmem, size = 0x12000, scoped, tag = 'internal scratch']
  %s0 = inlined_call_operand.hbm [shape: f32[22], index: 0, kind: input, shape index: {}]
  %s1 = inlined_call_operand.hbm [shape: f32[1,1024], index: 1, kind: input, shape index: {}]
  %s2 = inlined_call_operand.hbm [shape: f32[1,1024], index: 2, kind: output, shape index: {}]
  %s3 = sld [smem:[#allocation0]]
  $region26: #{tpu_custom_call.1} parent=0
    _
  %s5 = ssub.s32 1, %s3
  %s6 = scalar_select 0, %s5, %s3
  $region1: #{tpu_custom_call.1} parent=0
    #allocation2 [shape = 'u8[512]{0}', space=smem, size = 0x200, scoped, tag = 'input window, operand 0, single buffered']
    #allocation3 [shape = 's32[1]{0}', space=sflag, size = 0x4, scoped, tag = 'scoped memory for tpu_custom_call.1']
    #allocation4 [shape = 's32[1]{0}', space=sflag, size = 0x4, scoped, tag = 'scoped memory for tpu_custom_call.1']
    #allocation5 [shape = 's32[1]{0}', space=sflag, size = 0x4, scoped, tag = 'scoped memory for tpu_custom_call.1']
    #allocation6 [shape = 'u8[4096]{0}', space=vmem, size = 0x1000, scoped, tag = 'input window, operand 1, single buffered']
    #allocation7 [shape = 'u8[4096]{0}', space=vmem, size = 0x1000, scoped, tag = 'output window, operand 0, single buffered']
    %7 = vsyncpa [#allocation5], 0
    %8 = vsyncpa [#allocation3], 0
    %9 = vsyncpa [#allocation4], 0
    // Predicated region
    $region2: #{tpu_custom_call.1} parent=1 // pred_check
      _
    $region3: #{tpu_custom_call.1} parent=1 // pred_check_branch
      %11 = sbr.rel (0) target = $region5
    $region4: #{tpu_custom_call.1} parent=1 // pred_region
      %s13 = ssub.s32 16, 16
      %14 = vsyncadd [#allocation5], %s13
      %17 = dma.hbm_to_smem %s0, 16, [#allocation2], [#allocation5]
    $region5: #{tpu_custom_call.1} parent=1 // pred_fallthru
      _
    // Predicated region
    $region6: #{tpu_custom_call.1} parent=1 // pred_check
      _
    $region7: #{tpu_custom_call.1} parent=1 // pred_check_branch
      %19 = sbr.rel (0) target = $region9
    $region8: #{tpu_custom_call.1} parent=1 // pred_region
      %s21 = ssub.s32 128, 128
      %22 = vsyncadd [#allocation3], %s21
      %s24 = sshll.u32 [#allocation6], 4
      %s25 = int_to_ptr.vmem [resolvable:$true] %s24
      %27 = dma.hbm_to_vmem [thread:$0]  %s1, 128, %s25, [#allocation3]
    $region9: #{tpu_custom_call.1} parent=1 // pred_fallthru
      _
    // Predicated region
    $region10: #{tpu_custom_call.1} parent=1 // pred_check
      _
    $region11: #{tpu_custom_call.1} parent=1 // pred_check_branch
      %29 = sbr.rel (0) target = $region13
    $region12: #{tpu_custom_call.1} parent=1 // pred_region
      %30 = dma.done [#allocation5], 16
    $region13: #{tpu_custom_call.1} parent=1 // pred_fallthru
      _
    // Predicated region
    $region14: #{tpu_custom_call.1} parent=1 // pred_check
      _
    $region15: #{tpu_custom_call.1} parent=1 // pred_check_branch
      %32 = sbr.rel (0) target = $region17
    $region16: #{tpu_custom_call.1} parent=1 // pred_region
      %33 = dma.done [#allocation3], 128
    $region17: #{tpu_custom_call.1} parent=1 // pred_fallthru
      _
    %34 = sfence
    %v35 = vld [vmem:[#allocation6] sm:$0xff]
    %s36 = sld [smem:[#allocation2]]
    %v37 = vstv %s36
    %v38 = vmul.f32 %v35, %v37
    %s39 = sld [smem:[#allocation2 + $0x3]]
    %v40 = vstv %s39
    %v41 = vadd.f32 %v38, %v40
    %v42 = vmax.f32 %v41, 0.0
    %s43 = sld [smem:[#allocation2 + $0x1]]
    %v44 = vstv %s43
    %v45 = vmul.f32 %v35, %v44
    %s46 = sld [smem:[#allocation2 + $0x4]]
    %v47 = vstv %s46
    %v48 = vadd.f32 %v45, %v47
    %v49 = vmax.f32 %v48, 0.0
    %s50 = sld [smem:[#allocation2 + $0x2]]
    %v51 = vstv %s50
    %v52 = vmul.f32 %v35, %v51
    %s53 = sld [smem:[#allocation2 + $0x5]]
    %v54 = vstv %s53
    %v55 = vadd.f32 %v52, %v54
    %v56 = vmax.f32 %v55, 0.0
    %s57 = sld [smem:[#allocation2 + $0x6]]
    %v58 = vstv %s57
    %v59 = vmul.f32 %v42, %v58
    %s60 = sld [smem:[#allocation2 + $0x9]]
    %v61 = vstv %s60
    %v62 = vmul.f32 %v49, %v61
    %v63 = vadd.f32 %v59, %v62
    %s64 = sld [smem:[#allocation2 + $0xc]]
    %v65 = vstv %s64
    %v66 = vmul.f32 %v56, %v65
    %v67 = vadd.f32 %v63, %v66
    %s68 = sld [smem:[#allocation2 + $0xf]]
    %v69 = vstv %s68
    %v70 = vadd.f32 %v67, %v69
    %v71 = vmax.f32 %v70, 0.0
    %s72 = sld [smem:[#allocation2 + $0x12]]
    %v73 = vstv %s72
    %v74 = vmul.f32 %v71, %v73
    %s75 = sld [smem:[#allocation2 + $0x7]]
    %v76 = vstv %s75
    %v77 = vmul.f32 %v42, %v76
    %s78 = sld [smem:[#allocation2 + $0xa]]
    %v79 = vstv %s78
    %v80 = vmul.f32 %v49, %v79
    %v81 = vadd.f32 %v77, %v80
    %s82 = sld [smem:[#allocation2 + $0xd]]
    %v83 = vstv %s82
    %v84 = vmul.f32 %v56, %v83
    %v85 = vadd.f32 %v81, %v84
    %s86 = sld [smem:[#allocation2 + $0x10]]
    %v87 = vstv %s86
    %v88 = vadd.f32 %v85, %v87
    %v89 = vmax.f32 %v88, 0.0
    %s90 = sld [smem:[#allocation2 + $0x13]]
    %v91 = vstv %s90
    %v92 = vmul.f32 %v89, %v91
    %v93 = vadd.f32 %v74, %v92
    %s94 = sld [smem:[#allocation2 + $0x8]]
    %v95 = vstv %s94
    %v96 = vmul.f32 %v42, %v95
    %s97 = sld [smem:[#allocation2 + $0xb]]
    %v98 = vstv %s97
    %v99 = vmul.f32 %v49, %v98
    %v100 = vadd.f32 %v96, %v99
    %s101 = sld [smem:[#allocation2 + $0xe]]
    %v102 = vstv %s101
    %v103 = vmul.f32 %v56, %v102
    %v104 = vadd.f32 %v100, %v103
    %s105 = sld [smem:[#allocation2 + $0x11]]
    %v106 = vstv %s105
    %v107 = vadd.f32 %v104, %v106
    %v108 = vmax.f32 %v107, 0.0
    %s109 = sld [smem:[#allocation2 + $0x14]]
    %v110 = vstv %s109
    %v111 = vmul.f32 %v108, %v110
    %v112 = vadd.f32 %v93, %v111
    %s113 = sld [smem:[#allocation2 + $0x15]]
    %v114 = vstv %s113
    %v115 = vadd.f32 %v112, %v114
    %116 = vst [vmem:[#allocation7] sm:$0xff] %v115
    // Predicated region
    $region18: #{tpu_custom_call.1} parent=1 // pred_check
      _
    $region19: #{tpu_custom_call.1} parent=1 // pred_check_branch
      %118 = sbr.rel (0) target = $region21
    $region20: #{tpu_custom_call.1} parent=1 // pred_region
      %s120 = ssub.s32 128, 128
      %121 = vsyncadd [#allocation4], %s120
      %s123 = sshll.u32 [#allocation7], 4
      %s124 = int_to_ptr.vmem [resolvable:$true] %s123
      %126 = dma.vmem_to_hbm [thread:$0]  %s124, 128, %s2, [#allocation4]
    $region21: #{tpu_custom_call.1} parent=1 // pred_fallthru
      _
    // Predicated region
    $region22: #{tpu_custom_call.1} parent=1 // pred_check
      _
    $region23: #{tpu_custom_call.1} parent=1 // pred_check_branch
      %128 = sbr.rel (0) target = $region25
    $region24: #{tpu_custom_call.1} parent=1 // pred_region
      %129 = dma.done [#allocation4], 128
    $region25: #{tpu_custom_call.1} parent=1 // pred_fallthru
      _
    %130 = vsyncpa [#allocation3], 1
    %131 = vsyncpa [#allocation4], 1
    %132 = vsyncpa [#allocation5], 1

</llo_original>
